<compile_context>
chip_gen: v7x
topology: tpu7x:2x2x1
jax: 0.10.0
libtpu: 0.0.40
codegen_flags: <defaults>
</compile_context>

<pallas_src>
import functools

import jax
import jax.numpy as jnp
from jax import lax
from jax.experimental import pallas as pl
from jax.experimental.pallas import tpu as pltpu


def _round_up(x, m):
    return (x + m - 1) // m * m


def _cdiv(a, b):
    return (a + b - 1) // b


def _focal_loss_kernel(x_ref, t_ref, at_ref, out_ref, acc_ref, *,
                       gamma, n_total, tiles_per_split, class_major,
                       use_mxu_reduce):
    i = pl.program_id(0)   # parallel split (megacore axis on v7x)
    j = pl.program_id(1)   # serial reduction axis within the split

    @pl.when(j == 0)
    def _init():
        acc_ref[...] = jnp.zeros_like(acc_ref)

    x = x_ref[...].astype(jnp.float32)        # (C, tn) or (tn, C)
    t = t_ref[...]                            # (1, tn) or (tn, 1) int32
    alpha_t = at_ref[...].astype(jnp.float32)  # same shape as t, f32

    if class_major:
        c, tn = x.shape
        class_axis, row_axis = 0, 1
    else:
        tn, c = x.shape
        class_axis, row_axis = 1, 0

    # Global row index of every row in this block. Rows were zero-padded in the
    # wrapper; mask their contribution out with a select (never 0 * NaN).
    row0 = (i * tiles_per_split + j) * tn
    row_ids = row0 + lax.broadcasted_iota(jnp.int32, t.shape, row_axis)
    valid = row_ids < n_total

    # one-hot(targets) via iota compare along the class axis.
    onehot = (lax.broadcasted_iota(jnp.int32, x.shape, class_axis)
              == t).astype(jnp.float32)

    # log-sum-exp over the class axis.
    m = jnp.max(x, axis=class_axis, keepdims=True)
    e = jnp.exp(x - m)                                    # only dense EUP op
    if use_mxu_reduce and not class_major:
        # Route the class-dim sums through the otherwise idle MXU (large C).
        ones_c = jnp.ones((c, 1), jnp.float32)
        denom = jnp.dot(e, ones_c, preferred_element_type=jnp.float32)
        x_t = jnp.dot(x * onehot, ones_c, preferred_element_type=jnp.float32)
    else:
        denom = jnp.sum(e, axis=class_axis, keepdims=True)
        x_t = jnp.sum(x * onehot, axis=class_axis, keepdims=True)
    lse = m + jnp.log(denom)

    ce_t = lse - x_t                 # = -log softmax(x)[target], finite
    p_t = jnp.exp(x_t - lse)

    one_m = jnp.maximum(1.0 - p_t, 0.0)
    g = float(gamma)
    if g == 2.0:
        focal_w = one_m * one_m      # free VPU multiply (default gamma)
    elif g == 1.0:
        focal_w = one_m
    elif g == 0.0:
        focal_w = jnp.ones_like(one_m)
    else:
        focal_w = jnp.power(one_m, jnp.float32(g))

    contrib = jnp.where(valid, focal_w * alpha_t * ce_t, 0.0)
    # Per-lane vector accumulation; collapse to a scalar only at finalize.
    acc_ref[...] = acc_ref[...] + contrib

    @pl.when(j == pl.num_programs(1) - 1)
    def _finalize():
        total = jnp.sum(acc_ref[...])
        out_ref[...] = jnp.zeros(out_ref.shape, out_ref.dtype) + total


def focal_loss_multiclass(inputs, targets, alpha, gamma=2.0, max_tile_rows=None):
    """inputs: (N, C) logits (any float dtype); targets: (N,) int; alpha: (C,).

    Returns the scalar mean focal loss (PyTorch multi_class_focal_loss,
    reduction='mean', i.e. mean over the (N, C) loss matrix).
    """
    n, c = inputs.shape
    x_itemsize = jnp.dtype(inputs.dtype).itemsize

    # Small class counts -> class-major layout (rows on the lane axis).
    class_major = c < 128
    if class_major:
        row_granule = 128                       # rows live on lanes
    else:
        row_granule = max(8, 32 // x_itemsize)  # rows live on sublanes

    # VMEM byte budget per logits block (double-buffered => 2x this).
    budget = 4 * 1024 * 1024
    tile_n = max(row_granule,
                 (budget // max(1, c * x_itemsize)) // row_granule * row_granule)
    if max_tile_rows is not None:
        tile_n = max(row_granule, (max_tile_rows // row_granule) * row_granule)
    tile_n = min(tile_n, _round_up(n, row_granule))

    n_tiles = _cdiv(n, tile_n)
    # Two-way split feeds both TensorCores on v7x; runs serially (and still
    # correctly) on single-core v5e/v6e.
    num_splits = 2 if n_tiles >= 2 else 1
    tiles_per_split = _cdiv(n_tiles, num_splits)
    padded_n = num_splits * tiles_per_split * tile_n
    pad_rows = padded_n - n

    targets_i32 = targets.astype(jnp.int32)
    alpha_t = alpha.astype(jnp.float32)[targets_i32]      # (n,) gather, hoisted

    if class_major:
        x = jnp.pad(inputs.T, ((0, 0), (0, pad_rows)))                 # (c, Np)
        t2d = jnp.pad(targets_i32, (0, pad_rows)).reshape(1, padded_n)
        a2d = jnp.pad(alpha_t, (0, pad_rows)).reshape(1, padded_n)
        x_spec = pl.BlockSpec((c, tile_n),
                              lambda i, j: (0, i * tiles_per_split + j))
        vec_spec = pl.BlockSpec((1, tile_n),
                                lambda i, j: (0, i * tiles_per_split + j))
        acc_shape = (1, tile_n)
    else:
        x = jnp.pad(inputs, ((0, pad_rows), (0, 0)))                   # (Np, c)
        t2d = jnp.pad(targets_i32, (0, pad_rows)).reshape(padded_n, 1)
        a2d = jnp.pad(alpha_t, (0, pad_rows)).reshape(padded_n, 1)
        x_spec = pl.BlockSpec((tile_n, c),
                              lambda i, j: (i * tiles_per_split + j, 0))
        vec_spec = pl.BlockSpec((tile_n, 1),
                                lambda i, j: (i * tiles_per_split + j, 0))
        acc_shape = (tile_n, 1)

    use_mxu_reduce = (not class_major) and c >= 512

    kernel = functools.partial(
        _focal_loss_kernel,
        gamma=float(gamma), n_total=n, tiles_per_split=tiles_per_split,
        class_major=class_major, use_mxu_reduce=use_mxu_reduce)

    # Derive the VMEM limit from the actual buffers (+ headroom), capped so it
    # is legal on every generation (v7x has 64 MiB total).
    buf_bytes = (2 * tile_n * c * x_itemsize      # double-buffered logits
                 + 2 * tile_n * 4 * 2             # targets + alpha_t
                 + tile_n * 4                     # accumulator scratch
                 + num_splits * 8 * 128 * 4)      # output slabs
    vmem_limit = int(min(64 * 1024 * 1024,
                         max(16 * 1024 * 1024, 2 * buf_bytes)))

    cost = pl.CostEstimate(
        flops=10 * n * c,
        transcendentals=n * c + 3 * n,
        bytes_accessed=n * c * x_itemsize + 8 * n + 4 * c
                       + num_splits * 8 * 128 * 4,
    )

    out = pl.pallas_call(
        kernel,
        out_shape=jax.ShapeDtypeStruct((num_splits, 8, 128), jnp.float32),
        grid_spec=pltpu.PrefetchScalarGridSpec(
            num_scalar_prefetch=0,
            grid=(num_splits, tiles_per_split),
            in_specs=[x_spec, vec_spec, vec_spec],
            out_specs=pl.BlockSpec((1, 8, 128), lambda i, j: (i, 0, 0)),
            scratch_shapes=[pltpu.VMEM(acc_shape, jnp.float32)],
        ),
        compiler_params=pltpu.CompilerParams(
            dimension_semantics=("parallel", "arbitrary"),
            vmem_limit_bytes=vmem_limit,
        ),
        cost_estimate=cost,
    )(x, t2d, a2d)

    per_split = out[:, 0, 0]                       # one partial sum per split
    return jnp.sum(per_split) / jnp.float32(n * c)  # reduction='mean' over (N,C)


def _focal_loss_ref(inputs, targets, alpha, gamma=2.0):
    """Pure-JAX reference mirroring PyTorch multi_class_focal_loss (mean)."""
    probs = jax.nn.softmax(inputs, axis=1)
    onehot = jax.nn.one_hot(targets, inputs.shape[1], dtype=jnp.float32)
    ce = -onehot * jnp.log(probs)
    p_t = jnp.sum(probs * onehot, axis=1)
    focal_w = (1.0 - p_t) ** gamma
    alpha_t = alpha[targets]
    loss = focal_w[:, None] * (alpha_t[:, None] * ce)
    return jnp.mean(loss)


if __name__ == "__main__":
    key = jax.random.PRNGKey(0)
    gamma = 2.0

    # (N, C, dtype, max_tile_rows) -- small shapes exercising every code path:
    # class-major (C<128), row-major, padding (N not tile-aligned), the
    # two-split parallel grid, the MXU class-reduce (C>=512), and bf16 inputs.
    configs = [
        (8, 16, jnp.float32, None),     # class-major, single tile
        (10, 16, jnp.float32, None),    # class-major, row padding
        (300, 16, jnp.float32, 128),    # class-major, 2-way split + multi-tile
        (16, 256, jnp.float32, None),   # row-major, single tile
        (48, 256, jnp.float32, 16),     # row-major, 2-way split + multi-tile
        (8, 512, jnp.float32, None),    # row-major, MXU class reduction
        (16, 16, jnp.bfloat16, None),   # native bf16 logits
    ]

    for idx, (N, C, dt, mtr) in enumerate(configs):
        k1, k2 = jax.random.split(jax.random.fold_in(key, idx))
        logits = jax.random.normal(k1, (N, C), dtype=jnp.float32).astype(dt)
        targets = jax.random.randint(k2, (N,), 0, C, dtype=jnp.int32)
        alpha = jnp.linspace(0.5, 1.5, C, dtype=jnp.float32)

        out = focal_loss_multiclass(logits, targets, alpha, gamma=gamma,
                                    max_tile_rows=mtr)
        out = jax.block_until_ready(out)

        ref = _focal_loss_ref(logits.astype(jnp.float32), targets, alpha,
                              gamma=gamma)
        assert jnp.allclose(out, ref, rtol=2e-5, atol=1e-6), \
            (N, C, dt, float(out), float(ref))

    print("KERNEL_OK")
</pallas_src>

<mosaic_0001>
module attributes {stable_mosaic.version = 11 : i64} {
  func.func @_focal_loss_kernel(%arg0: i32, %arg1: i32, %arg2: memref<16x128xf32, #tpu.memory_space<vmem>>, %arg3: memref<1x128xi32, #tpu.memory_space<vmem>>, %arg4: memref<1x128xf32, #tpu.memory_space<vmem>>, %arg5: memref<1x8x128xf32, #tpu.memory_space<vmem>>, %arg6: memref<1x128xf32, #tpu.memory_space<vmem>>) attributes {dimension_semantics = [#tpu.dimension_semantics<parallel>, #tpu.dimension_semantics<arbitrary>], iteration_bounds = array<i64: 1, 1>, scalar_prefetch = 0 : i64, scratch_operands = 1 : i64, tpu.core_type = #tpu.core_type<tc>, window_params = [{transform_indices = @transform_0, window_bounds = array<i64: 16, 128>}, {transform_indices = @transform_1, window_bounds = array<i64: 1, 128>}, {transform_indices = @transform_2, window_bounds = array<i64: 1, 128>}, {transform_indices = @transform_3, window_bounds = array<i64: 1, 8, 128>}]} {
    %c0_i32 = arith.constant 0 : i32
    %0 = arith.cmpi eq, %arg1, %c0_i32 : i32
    %1 = arith.extui %0 : i1 to i32
    %c0_i32_0 = arith.constant 0 : i32
    %2 = arith.cmpi ne, %1, %c0_i32_0 : i32
    scf.if %2 {
      %cst_17 = arith.constant 0.000000e+00 : f32
      %49 = vector.broadcast %cst_17 : f32 to vector<1x128xf32>
      %c0_18 = arith.constant 0 : index
      %c0_19 = arith.constant 0 : index
      %50 = vector.load %arg6[%c0_18, %c0_19] : memref<1x128xf32, #tpu.memory_space<vmem>>, vector<1x128xf32>
      tpu.vector_store %arg6[%c0_18, %c0_19], %49 {strides = array<i32>} : memref<1x128xf32, #tpu.memory_space<vmem>>, vector<1x128xf32>,
    } else {
    }
    %c0 = arith.constant 0 : index
    %c0_1 = arith.constant 0 : index
    %3 = vector.load %arg2[%c0, %c0_1] : memref<16x128xf32, #tpu.memory_space<vmem>>, vector<16x128xf32>
    %c0_2 = arith.constant 0 : index
    %c0_3 = arith.constant 0 : index
    %4 = vector.load %arg3[%c0_2, %c0_3] : memref<1x128xi32, #tpu.memory_space<vmem>>, vector<1x128xi32>
    %c0_4 = arith.constant 0 : index
    %c0_5 = arith.constant 0 : index
    %5 = vector.load %arg4[%c0_4, %c0_5] : memref<1x128xf32, #tpu.memory_space<vmem>>, vector<1x128xf32>
    %c1_i32 = arith.constant 1 : i32
    %6 = arith.muli %arg0, %c1_i32 : i32
    %7 = arith.addi %6, %arg1 : i32
    %c128_i32 = arith.constant 128 : i32
    %8 = arith.muli %7, %c128_i32 : i32
    %9 = tpu.iota {dimensions = array<i32: 1>} : vector<1x128xi32>
    %10 = vector.broadcast %8 : i32 to vector<1x128xi32>
    %11 = arith.addi %10, %9 : vector<1x128xi32>
    %c8_i32 = arith.constant 8 : i32
    %12 = vector.broadcast %c8_i32 : i32 to vector<1x128xi32>
    %13 = arith.cmpi slt, %11, %12 : vector<1x128xi32>
    %14 = tpu.iota {dimensions = array<i32: 0>} : vector<16x128xi32>
    %15 = vector.broadcast %4 : vector<1x128xi32> to vector<16x128xi32>
    %16 = arith.cmpi eq, %14, %15 : vector<16x128xi32>
    %17 = arith.extui %16 : vector<16x128xi1> to vector<16x128xi32>
    %18 = arith.sitofp %17 : vector<16x128xi32> to vector<16x128xf32>
    %cst = arith.constant dense<0xFF800000> : vector<128xf32>
    %19 = vector.multi_reduction <maximumf>, %3, %cst [0] : vector<16x128xf32> to vector<128xf32>
    %20 = vector.shape_cast %19 : vector<128xf32> to vector<1x128xf32>
    %21 = vector.broadcast %20 : vector<1x128xf32> to vector<16x128xf32>
    %22 = arith.subf %3, %21 : vector<16x128xf32>
    %23 = math.exp %22 : vector<16x128xf32>
    %cst_6 = arith.constant dense<0.000000e+00> : vector<128xf32>
    %24 = vector.multi_reduction <add>, %23, %cst_6 [0] : vector<16x128xf32> to vector<128xf32>
    %25 = vector.shape_cast %24 : vector<128xf32> to vector<1x128xf32>
    %26 = arith.mulf %3, %18 : vector<16x128xf32>
    %cst_7 = arith.constant dense<0.000000e+00> : vector<128xf32>
    %27 = vector.multi_reduction <add>, %26, %cst_7 [0] : vector<16x128xf32> to vector<128xf32>
    %28 = vector.shape_cast %27 : vector<128xf32> to vector<1x128xf32>
    %29 = math.log %25 : vector<1x128xf32>
    %30 = arith.addf %20, %29 : vector<1x128xf32>
    %31 = arith.subf %30, %28 : vector<1x128xf32>
    %32 = arith.subf %28, %30 : vector<1x128xf32>
    %33 = math.exp %32 : vector<1x128xf32>
    %cst_8 = arith.constant 1.000000e+00 : f32
    %34 = vector.broadcast %cst_8 : f32 to vector<1x128xf32>
    %35 = arith.subf %34, %33 : vector<1x128xf32>
    %cst_9 = arith.constant 0.000000e+00 : f32
    %36 = vector.broadcast %cst_9 : f32 to vector<1x128xf32>
    %37 = arith.maximumf %35, %36 : vector<1x128xf32>
    %38 = arith.mulf %37, %37 : vector<1x128xf32>
    %39 = arith.mulf %38, %5 : vector<1x128xf32>
    %40 = arith.mulf %39, %31 : vector<1x128xf32>
    %cst_10 = arith.constant 0.000000e+00 : f32
    %41 = vector.broadcast %cst_10 : f32 to vector<1x128xf32>
    %42 = arith.select %13, %40, %41 : vector<1x128xi1>, vector<1x128xf32>
    %c0_11 = arith.constant 0 : index
    %c0_12 = arith.constant 0 : index
    %43 = vector.load %arg6[%c0_11, %c0_12] : memref<1x128xf32, #tpu.memory_space<vmem>>, vector<1x128xf32>
    %44 = arith.addf %43, %42 : vector<1x128xf32>
    %c0_13 = arith.constant 0 : index
    %c0_14 = arith.constant 0 : index
    %45 = vector.load %arg6[%c0_13, %c0_14] : memref<1x128xf32, #tpu.memory_space<vmem>>, vector<1x128xf32>
    tpu.vector_store %arg6[%c0_13, %c0_14], %44 {strides = array<i32>} : memref<1x128xf32, #tpu.memory_space<vmem>>, vector<1x128xf32>,
    %c0_i32_15 = arith.constant 0 : i32
    %46 = arith.cmpi eq, %arg1, %c0_i32_15 : i32
    %47 = arith.extui %46 : i1 to i32
    %c0_i32_16 = arith.constant 0 : i32
    %48 = arith.cmpi ne, %47, %c0_i32_16 : i32
    scf.if %48 {
      %c0_17 = arith.constant 0 : index
      %c0_18 = arith.constant 0 : index
      %49 = vector.load %arg6[%c0_17, %c0_18] : memref<1x128xf32, #tpu.memory_space<vmem>>, vector<1x128xf32>
      %50 = vector.shape_cast %49 : vector<1x128xf32> to vector<1x1x128xf32>
      %cst_19 = arith.constant dense<0.000000e+00> : vector<1xf32>
      %51 = vector.multi_reduction <add>, %50, %cst_19 [1, 2] : vector<1x1x128xf32> to vector<1xf32>
      %52 = vector.shape_cast %51 : vector<1xf32> to vector<1x1x1xf32>
      %53 = vector.extract %52[0, 0, 0] : f32 from vector<1x1x1xf32>
      %cst_20 = arith.constant 0.000000e+00 : f32
      %54 = vector.broadcast %cst_20 : f32 to vector<1x8x128xf32>
      %55 = vector.broadcast %53 : f32 to vector<1x8x128xf32>
      %56 = arith.addf %54, %55 : vector<1x8x128xf32>
      %c0_21 = arith.constant 0 : index
      %c0_22 = arith.constant 0 : index
      %c0_23 = arith.constant 0 : index
      %57 = vector.load %arg5[%c0_21, %c0_22, %c0_23] : memref<1x8x128xf32, #tpu.memory_space<vmem>>, vector<1x8x128xf32>
      tpu.vector_store %arg5[%c0_21, %c0_22, %c0_23], %56 {strides = array<i32>} : memref<1x8x128xf32, #tpu.memory_space<vmem>>, vector<1x8x128xf32>,
    } else {
    }
    return
  }
  func.func @transform_0(%arg0: i32, %arg1: i32) -> (i32, i32) {
    %c1_i32 = arith.constant 1 : i32
    %0 = arith.muli %arg0, %c1_i32 : i32
    %1 = arith.addi %0, %arg1 : i32
    %c0_i32 = arith.constant 0 : i32
    %c0_i32_0 = arith.constant 0 : i32
    return %c0_i32, %1 : i32, i32
  }
  func.func @transform_1(%arg0: i32, %arg1: i32) -> (i32, i32) {
    %c1_i32 = arith.constant 1 : i32
    %0 = arith.muli %arg0, %c1_i32 : i32
    %1 = arith.addi %0, %arg1 : i32
    %c0_i32 = arith.constant 0 : i32
    %c0_i32_0 = arith.constant 0 : i32
    return %c0_i32, %1 : i32, i32
  }
  func.func @transform_2(%arg0: i32, %arg1: i32) -> (i32, i32) {
    %c1_i32 = arith.constant 1 : i32
    %0 = arith.muli %arg0, %c1_i32 : i32
    %1 = arith.addi %0, %arg1 : i32
    %c0_i32 = arith.constant 0 : i32
    %c0_i32_0 = arith.constant 0 : i32
    return %c0_i32, %1 : i32, i32
  }
  func.func @transform_3(%arg0: i32, %arg1: i32) -> (i32, i32, i32) {
    %c0_i32 = arith.constant 0 : i32
    %c0_i32_0 = arith.constant 0 : i32
    %c0_i32_1 = arith.constant 0 : i32
    return %arg0, %c0_i32, %c0_i32_0 : i32, i32, i32
  }
}

</mosaic_0001>

<llo_original>
// kernel: tpu_custom_call.1
$region0: #{tpu_custom_call.1}
  #allocation0 [shape = 'u32[]', space=smem, size = 0x4, offset = 0x4, fixed_abs, tag = 'smem constant byte address 0x4 - core index']
  #allocation1 [shape = 'u32[144,128]{1,0:T(1,128)}', space=vmem, size = 0x12000, scoped, tag = 'internal scratch']
  #allocation2 [shape = 'f32[1,128]{1,0:T(1,128)}', space=vmem, size = 0x200, scoped, tag = 'scratch operand']
  %s0 = inlined_call_operand.hbm [shape: f32[16,128], index: 0, kind: input, shape index: {}]
  %s1 = inlined_call_operand.vmem [shape: s32[1,128], index: 1, kind: input, shape index: {}]
  %s2 = inlined_call_operand.vmem [shape: f32[1,128], index: 2, kind: input, shape index: {}]
  %s3 = inlined_call_operand.hbm [shape: f32[1,8,128], index: 3, kind: output, shape index: {}]
  %s4 = sld [smem:[#allocation0]]
  $region34: #{tpu_custom_call.1} parent=0
    _
  %s6 = ssub.s32 1, %s4
  %s7 = scalar_select 0, %s6, %s4
  $region1: #{tpu_custom_call.1} parent=0
    #allocation3 [shape = 'u8[8192]{0}', space=vmem, size = 0x2000, scoped, tag = 'input window, operand 0, single buffered']
    #allocation4 [shape = 's32[1]{0}', space=sflag, size = 0x4, scoped, tag = 'scoped memory for tpu_custom_call.1']
    #allocation5 [shape = 's32[1]{0}', space=sflag, size = 0x4, scoped, tag = 'scoped memory for tpu_custom_call.1']
    #allocation6 [shape = 'u8[4096]{0}', space=vmem, size = 0x1000, scoped, tag = 'output window, operand 0, single buffered']
    %8 = vsyncpa [#allocation4], 0
    %9 = vsyncpa [#allocation5], 0
    // Predicated region
    $region2: #{tpu_custom_call.1} parent=1 // pred_check
      _
    $region3: #{tpu_custom_call.1} parent=1 // pred_check_branch
      %11 = sbr.rel (0) target = $region5
    $region4: #{tpu_custom_call.1} parent=1 // pred_region
      %s12 = sadd.s32 0, 0
      %s14 = ssub.s32 256, 256
      %15 = vsyncadd [#allocation4], %s14
      %s16 = smul.addr %s12, 128
      %s17 = scalar_lea.hbm %s0, %s16
      %s18 = sshll.u32 [#allocation3], 4
      %s19 = int_to_ptr.vmem [resolvable:$true] %s18
      %24 = dma.hbm_to_vmem [thread:$0]  %s17, 256, %s19, [#allocation4], 128, 128, 8
    $region5: #{tpu_custom_call.1} parent=1 // pred_fallthru
      _
    // Predicated region
    $region6: #{tpu_custom_call.1} parent=1 // pred_check
      _
    $region7: #{tpu_custom_call.1} parent=1 // pred_check_branch
      %26 = sbr.rel (0) target = $region9
    $region8: #{tpu_custom_call.1} parent=1 // pred_region
      %s27 = sadd.s32 0, 0
      %p28 = scmp.lt.s32.totalorder %s27, 0
      %s29 = scalar_select %p28, %s27, 0
      %s30 = scalar_lea.vmem %s1, %s29
      %s31 = sadd.s32 0, 0
    $region9: #{tpu_custom_call.1} parent=1 // pred_fallthru
      _
    // Predicated region
    $region10: #{tpu_custom_call.1} parent=1 // pred_check
      _
    $region11: #{tpu_custom_call.1} parent=1 // pred_check_branch
      %33 = sbr.rel (0) target = $region13
    $region12: #{tpu_custom_call.1} parent=1 // pred_region
      %s34 = sadd.s32 0, 0
      %p35 = scmp.lt.s32.totalorder %s34, 0
      %s36 = scalar_select %p35, %s34, 0
      %s37 = scalar_lea.vmem %s2, %s36
      %s38 = sadd.s32 0, 0
    $region13: #{tpu_custom_call.1} parent=1 // pred_fallthru
      _
    // Predicated region
    $region14: #{tpu_custom_call.1} parent=1 // pred_check
      _
    $region15: #{tpu_custom_call.1} parent=1 // pred_check_branch
      %40 = sbr.rel (0) target = $region17
    $region16: #{tpu_custom_call.1} parent=1 // pred_region
      %41 = dma.done [#allocation4], 256
    $region17: #{tpu_custom_call.1} parent=1 // pred_fallthru
      _
    %s42 = sadd.s32 0, 0
    %p43 = scmp.lt.s32.totalorder %s42, 0
    %s44 = scalar_select %p43, %s42, 0
    %s45 = scalar_lea.vmem %s1, %s44
    %s46 = sadd.s32 0, 0
    %p47 = scmp.lt.s32.totalorder %s46, 0
    %s48 = scalar_select %p47, %s46, 0
    %s49 = scalar_lea.vmem %s2, %s48
    %s50 = sadd.s32 0, 0
    %s51 = sadd.s32 0, 0
    %p52 = scmp.lt.s32.totalorder %s51, 0
    %s53 = scalar_select %p52, %s51, 0
    %s54 = scalar_lea.vmem %s1, %s53
    %s55 = sadd.s32 0, 0
    %s56 = sadd.s32 0, 0
    %p57 = scmp.lt.s32.totalorder %s56, 0
    %s58 = scalar_select %p57, %s56, 0
    %s59 = scalar_lea.vmem %s2, %s58
    %s60 = sadd.s32 0, 0
    %p61 = scmp.eq.s32.totalorder 0, 0
    // Predicated region
    $region18: #{tpu_custom_call.1} parent=1 // pred_check
      %p62 = pneg %p61
    $region19: #{tpu_custom_call.1} parent=1 // pred_check_branch
      %64 = sbr.rel (%p62) target = $region21
    $region20: #{tpu_custom_call.1} parent=1 // pred_region
      %65 = vst [vmem:[#allocation2] sm:$0x1] 0.0
    $region21: #{tpu_custom_call.1} parent=1 // pred_fallthru
      _
    %v66 = vld [vmem:[#allocation3] sm:$0xff]
    %v67 = vld [vmem:[#allocation3 + $0x8] sm:$0xff]
    %v68 = vld [vmem:[%s54] sm:$0x1]
    %v69 = vld [vmem:[%s59] sm:$0x1]
    %s70 = sadd.s32 0, 0
    %s71 = smul.u32 %s70, 128
    %v72 = vlaneseq
    %v73 = vand.u32 %v72, 127
    %v74 = vstv %s71
    %v75 = vadd.s32 %v74, %v73
    %vm76 = vcmp.lt.s32.totalorder %v75, 8
    %v77 = vlaneseq
    %v78 = vshrl.u32 %v77, 7
    %v79 = vadd.s32 %v78, 8
    %v80 = vlaneseq
    %v81 = vshrl.u32 %v80, 7
    %v82 = vsub.s32 0, %v81
    %v83 = vrot.slane %v68, %v82
    %vm84 = vcmp.eq.s32.totalorder %v78, %v83
    %vm85 = vcmp.eq.s32.totalorder %v79, %v83
    %v86 = vsel %vm84, 1, 0
    %v87 = vsel %vm85, 1, 0
    %v88 = vcvt.s32.f32 %v86
    %v89 = vcvt.s32.f32 %v87
    %v90 = vmax.f32 %v66, %v67
    %v91 = vrot.slane %v90, 4
    %v92 = vmax.f32 %v90, %v91
    %v93 = vrot.slane %v92, 2
    %v94 = vmax.f32 %v92, %v93
    %v95 = vrot.slane %v94, 1
    %v96 = vmax.f32 %v94, %v95
    %v97 = vsub.f32 %v66, %v96
    %v98 = vsub.f32 %v67, %v96
    %v99 = vmul.f32 %v97, 1.442695
    %v100 = vpow.pop %v99
    %v101 = vmul.f32 %v98, 1.442695
    %v102 = vpow.pop %v101
    %v103 = vadd.f32 %v100, %v102
    %v104 = vrot.slane %v103, 4
    %v105 = vadd.f32 %v103, %v104
    %v106 = vrot.slane %v105, 2
    %v107 = vadd.f32 %v105, %v106
    %v108 = vrot.slane %v107, 1
    %v109 = vadd.f32 %v107, %v108
    %v110 = vmul.f32 %v66, %v88
    %v111 = vmul.f32 %v67, %v89
    %v112 = vadd.f32 %v110, %v111
    %v113 = vrot.slane %v112, 4
    %v114 = vadd.f32 %v112, %v113
    %v115 = vrot.slane %v114, 2
    %v116 = vadd.f32 %v114, %v115
    %v117 = vrot.slane %v116, 1
    %v118 = vadd.f32 %v116, %v117
    %v119 = vlog2.pop %v109
    %v120 = vmul.f32 %v119, 0.6931472
    %v121 = vadd.f32 %v96, %v120
    %v122 = vsub.f32 %v121, %v118
    %v123 = vsub.f32 %v118, %v121
    %v124 = vmul.f32 %v123, 1.442695
    %v125 = vpow.pop %v124
    %v126 = vsub.f32 1.0, %v125
    %v127 = vmax.f32 %v126, 0.0
    %v128 = vmul.f32 %v127, %v127
    %v129 = vmul.f32 %v128, %v69
    %v130 = vmul.f32 %v129, %v122
    %v131 = vsel %vm76, %v130, 0.0
    %v132 = vld [vmem:[#allocation2] sm:$0x1]
    %v133 = vadd.f32 %v132, %v131
    %134 = vst [vmem:[#allocation2] sm:$0x1] %v133
    // Predicated region
    $region22: #{tpu_custom_call.1} parent=1 // pred_check
      %p135 = pneg %p61
    $region23: #{tpu_custom_call.1} parent=1 // pred_check_branch
      %137 = sbr.rel (%p135) target = $region25
    $region24: #{tpu_custom_call.1} parent=1 // pred_region
      %v138 = vld [vmem:[#allocation2] sm:$0x1]
      %vm139 = vcmask 1040384
      %v140 = vsel %vm139, %v138, 0.0
      %141 = vadd.xlane.f32.xlu0 %v140
      %v142 = vpop.xlane.xlu0 %141
      %v143 = vrot.slane %v142, 4
      %v144 = vadd.f32 %v142, %v143
      %v145 = vrot.slane %v144, 2
      %v146 = vadd.f32 %v144, %v145
      %v147 = vrot.slane %v146, 1
      %v148 = vadd.f32 %v146, %v147
      %s149 = vtos %v148
      %v150 = vstv %s149
      %v151 = vadd.f32 %v150, 0.0
      %152 = vst [vmem:[#allocation6] sm:$0xff] %v151
    $region25: #{tpu_custom_call.1} parent=1 // pred_fallthru
      _
    // Predicated region
    $region26: #{tpu_custom_call.1} parent=1 // pred_check
      _
    $region27: #{tpu_custom_call.1} parent=1 // pred_check_branch
      %154 = sbr.rel (0) target = $region29
    $region28: #{tpu_custom_call.1} parent=1 // pred_region
      %s156 = ssub.s32 128, 128
      %157 = vsyncadd [#allocation5], %s156
      %s159 = sshll.u32 [#allocation6], 4
      %s160 = int_to_ptr.vmem [resolvable:$true] %s159
      %162 = dma.vmem_to_hbm [thread:$0]  %s160, 128, %s3, [#allocation5]
    $region29: #{tpu_custom_call.1} parent=1 // pred_fallthru
      _
    // Predicated region
    $region30: #{tpu_custom_call.1} parent=1 // pred_check
      _
    $region31: #{tpu_custom_call.1} parent=1 // pred_check_branch
      %164 = sbr.rel (0) target = $region33
    $region32: #{tpu_custom_call.1} parent=1 // pred_region
      %165 = dma.done [#allocation5], 128
    $region33: #{tpu_custom_call.1} parent=1 // pred_fallthru
      _
    %166 = vsyncpa [#allocation4], 1
    %167 = vsyncpa [#allocation5], 1

</llo_original>
